<compile_context>
chip_gen: v6e
topology: v6e:2x2x1
jax: 0.10.0
libtpu: 0.0.40
codegen_flags: <defaults>
</compile_context>

<pallas_src>
import jax
import jax.numpy as jnp
from jax import lax
from jax.experimental import pallas as pl
from jax.experimental.pallas import tpu as pltpu


_ACTIVATIONS = {
    "linear": lambda x: x,
    "tanh": jnp.tanh,
    "relu": lambda x: jnp.maximum(x, 0.0),
    "sigmoid": jax.nn.sigmoid,
}


def _make_kernel(activation, T, t_tile, n_t_tiles, has_projection, write_hidden):
    act = _ACTIVATIONS[activation]
    inv_t = 1.0 / T
    ragged_t = (T % t_tile) != 0

    def _body(emb_ref, w_ref, b_ref, hidden_ref, mean_ref):
        j = pl.program_id(1)                              # T-tile index (reduction axis)
        x = emb_ref[...]                                  # (bt, tt, E) f32

        if has_projection:
            bt, tt, e = x.shape
            h = w_ref.shape[1]
            # bf16 operands -> native MXU; accumulate in f32.  tt is sublane-aligned
            # (multiple of 8) or equals T, so the leading-dim merge is layout-free.
            p = jnp.dot(x.reshape(bt * tt, e).astype(jnp.bfloat16),
                        w_ref[...],
                        preferred_element_type=jnp.float32) + b_ref[...]
            out = act(p).reshape(bt, tt, h)
        else:
            out = act(x)

        if write_hidden:
            hidden_ref[...] = out.astype(hidden_ref.dtype)

        if ragged_t:
            # Zero the over-the-edge timesteps of the last T tile so they do not
            # pollute the mean (out-of-range hidden rows are dropped at writeback).
            tids = j * t_tile + lax.broadcasted_iota(jnp.int32, out.shape, 1)
            out = jnp.where(tids < T, out, 0.0)

        @pl.when(j == 0)
        def _():
            mean_ref[...] = jnp.zeros_like(mean_ref)

        mean_ref[...] += jnp.sum(out, axis=1, keepdims=True)

        @pl.when(j == n_t_tiles - 1)
        def _():
            mean_ref[...] *= inv_t

    if has_projection:
        def kernel(emb_ref, w_ref, b_ref, hidden_ref, mean_ref):
            _body(emb_ref, w_ref, b_ref, hidden_ref, mean_ref)
    elif write_hidden:
        def kernel(emb_ref, hidden_ref, mean_ref):
            _body(emb_ref, None, None, hidden_ref, mean_ref)
    else:
        def kernel(emb_ref, mean_ref):
            _body(emb_ref, None, None, None, mean_ref)
    return kernel


def _choose_tiles(B, T, E, H, vmem_limit):
    """Pick (batch_tile, t_tile) so pipelined blocks + temporaries fit the VMEM budget."""
    # Per (batch-row x timestep) bytes live per grid step: f32 emb block (double-buffered)
    # + f32 hidden block (double-buffered) + bf16 matmul copy + f32 activation temporary.
    per_row = E * 4 * 2 + H * 4 * 2 + E * 2 + H * 4
    budget = max(vmem_limit // 2, 1 << 20)       # leave headroom for compiler temporaries
    rows = max(budget // per_row, 8)             # rows = batch_tile * t_tile target
    if T <= rows:
        t_tile = T                               # full extent (always a legal block dim)
    else:
        t_tile = max(8, (rows // 8) * 8)         # sublane-aligned T tile
    bt = max(1, min(B, rows // t_tile))          # as large as fits (MXU M = bt*t_tile)
    for cand in range(bt, bt // 2, -1):          # prefer a divisor of B (no ragged tile)
        if B % cand == 0:
            bt = cand
            break
    return bt, t_tile


def encoder_average_forward(seq, lengths, embed_table,
                            proj_weight=None, proj_bias=None,
                            activation="linear", revise_embedding=None):
    """EncoderAverage.forward: returns (hidden, last_hidden, embedding).

    NOTE: the T-mean is intentionally UNMASKED (matches `output.mean(1)` in the PyTorch
    module), so padded timesteps contribute activation(bias) to last_hidden; `lengths`
    is fetched but unused, exactly like the original forward.
    """
    del lengths
    if activation not in _ACTIVATIONS:
        raise ValueError(f"unsupported activation: {activation}")

    B, T = seq.shape
    E = embed_table.shape[1]

    # Embedding lookup (padding_idx=0 row of embed_table is zero).  The gathered f32
    # embedding is returned as data.embedding and fed straight to the kernel: no pad,
    # no extra cast pass (the bf16 narrowing for the MXU happens in VMEM in-kernel).
    if revise_embedding is not None:
        embedding = revise_embedding
    else:
        embedding = jnp.take(embed_table, seq, axis=0)                 # [B, T, E]
    emb_f32 = embedding if embedding.dtype == jnp.float32 else embedding.astype(jnp.float32)

    has_projection = proj_weight is not None
    if has_projection:
        H = proj_weight.shape[0]
        w = proj_weight.T.astype(jnp.bfloat16)                         # [E, H] bf16 for MXU
        if proj_bias is None:                                          # nn.Linear(bias=False)
            b = jnp.zeros((1, H), jnp.float32)
        else:
            b = proj_bias.astype(jnp.float32).reshape(1, H)
    else:
        H = E

    # hidden == embedding exactly when there is neither projection nor a nonlinearity:
    # skip the identity matmul AND the hidden writeback (mean-only kernel).
    write_hidden = has_projection or activation != "linear"

    # VMEM budget: v7x has 64 MiB physical VMEM, v5e/v6e 128 MiB; raise the scoped limit.
    try:
        vmem_cap = pltpu.get_tpu_info().vmem_capacity_bytes
    except Exception:
        vmem_cap = 64 << 20
    vmem_limit = min(max(vmem_cap - (16 << 20), 16 << 20), 100 << 20)

    bt, tt = _choose_tiles(B, T, E, H, vmem_limit)
    nb, nt = pl.cdiv(B, bt), pl.cdiv(T, tt)

    kernel = _make_kernel(activation, T, tt, nt, has_projection, write_hidden)

    def _call(single_buffer_weights):
        wkw = dict(pipeline_mode=pl.Buffered(1)) if single_buffer_weights else {}
        in_specs = [pl.BlockSpec((bt, tt, E), lambda i, j: (i, j, 0))]
        operands = [emb_f32]
        if has_projection:
            in_specs += [pl.BlockSpec((E, H), lambda i, j: (0, 0), **wkw),   # resident W
                         pl.BlockSpec((1, H), lambda i, j: (0, 0), **wkw)]   # resident bias
            operands += [w, b]
        mean_spec = pl.BlockSpec((bt, 1, H), lambda i, j: (i, 0, 0))         # accumulator
        mean_shape = jax.ShapeDtypeStruct((B, 1, H), jnp.float32)
        if write_hidden:
            out_specs = (pl.BlockSpec((bt, tt, H), lambda i, j: (i, j, 0)), mean_spec)
            out_shape = (jax.ShapeDtypeStruct((B, T, H), jnp.float32), mean_shape)
        else:
            out_specs = mean_spec
            out_shape = mean_shape
        return pl.pallas_call(
            kernel,
            grid=(nb, nt),
            in_specs=in_specs,
            out_specs=out_specs,
            out_shape=out_shape,
            compiler_params=pltpu.CompilerParams(
                dimension_semantics=("parallel", "arbitrary"),
                vmem_limit_bytes=vmem_limit),
        )(*operands)

    try:
        outs = _call(True)      # single-buffer the grid-invariant weight/bias blocks
    except Exception:
        outs = _call(False)     # fall back if pipeline_mode=Buffered(1) is unsupported

    if write_hidden:
        hidden, mean = outs
    else:
        hidden, mean = embedding, outs        # identity projection + linear activation
    last_hidden = mean.reshape(B, H)          # (B,1,H) -> (B,H): metadata-only reshape
    return hidden, last_hidden, embedding


def _ref_encoder_average(embedding, proj_weight, proj_bias, activation):
    """Pure-JAX f32 reference of the module's forward."""
    x = embedding.astype(jnp.float32)
    if proj_weight is not None:
        bias = 0.0 if proj_bias is None else proj_bias.astype(jnp.float32)
        x = x @ proj_weight.T.astype(jnp.float32) + bias
    x = _ACTIVATIONS[activation](x)
    return x, x.mean(axis=1)


if __name__ == "__main__":
    # Small shapes consistent with the module.
    V, E, H = 16, 32, 32          # vocab_size, embed_size, hidden_size (projection=True)
    B, T = 2, 8                   # batch, max seq length

    key = jax.random.PRNGKey(0)
    k_seq, k_emb, k_w, k_b = jax.random.split(key, 4)

    lengths = jnp.array([8, 5], dtype=jnp.int32)
    seq = jax.random.randint(k_seq, (B, T), 1, V, dtype=jnp.int32)
    seq = jnp.where(jnp.arange(T)[None, :] < lengths[:, None], seq, 0)   # pad token = 0

    embed_table = 0.1 * jax.random.normal(k_emb, (V, E), jnp.float32)
    embed_table = embed_table.at[0, :].set(0.0)                          # padding_idx=0

    s = 1.0 / jnp.sqrt(E)
    proj_weight = jax.random.uniform(k_w, (H, E), jnp.float32, -s, s)    # nn.Linear weight
    proj_bias = jax.random.uniform(k_b, (H,), jnp.float32, -s, s)        # nn.Linear bias

    # --- projection=True, activation='tanh' ---
    hidden, last_hidden, embedding = encoder_average_forward(
        seq, lengths, embed_table, proj_weight, proj_bias, activation="tanh")
    jax.block_until_ready((hidden, last_hidden, embedding))
    ref_h, ref_m = _ref_encoder_average(embedding, proj_weight, proj_bias, "tanh")
    assert hidden.shape == (B, T, H) and last_hidden.shape == (B, H)
    assert embedding.shape == (B, T, E)
    # bf16 MXU operands -> compare against the f32 reference at bf16-level tolerance.
    assert jnp.allclose(hidden, ref_h, atol=1e-2, rtol=1e-2), "hidden mismatch (tanh)"
    assert jnp.allclose(last_hidden, ref_m, atol=1e-2, rtol=1e-2), "mean mismatch (tanh)"

    # --- projection=True, activation='linear' (module default) ---
    hidden, last_hidden, _ = encoder_average_forward(
        seq, lengths, embed_table, proj_weight, proj_bias, activation="linear")
    jax.block_until_ready((hidden, last_hidden))
    ref_h, ref_m = _ref_encoder_average(embedding, proj_weight, proj_bias, "linear")
    assert jnp.allclose(hidden, ref_h, atol=1e-2, rtol=1e-2), "hidden mismatch (linear)"
    assert jnp.allclose(last_hidden, ref_m, atol=1e-2, rtol=1e-2), "mean mismatch (linear)"

    # --- projection=False, activation='linear': identity projection, mean-only kernel ---
    hidden2, last_hidden2, embedding2 = encoder_average_forward(
        seq, lengths, embed_table, None, None, activation="linear")
    jax.block_until_ready((hidden2, last_hidden2))
    ref_h2, ref_m2 = _ref_encoder_average(embedding2, None, None, "linear")
    assert hidden2.shape == (B, T, E) and last_hidden2.shape == (B, E)
    assert jnp.allclose(hidden2, ref_h2, atol=1e-6), "hidden mismatch (no projection)"
    assert jnp.allclose(last_hidden2, ref_m2, atol=1e-6), "mean mismatch (no projection)"

    # TODO(synk): `keep_grads` / retain_grad has no forward-pass compute; not applicable here.
    print("KERNEL_OK")
</pallas_src>

<mosaic_0001>
module attributes {stable_mosaic.version = 11 : i64} {
  func.func @kernel(%arg0: i32, %arg1: i32, %arg2: memref<2x8x32xf32, #tpu.memory_space<vmem>>, %arg3: memref<32x32xbf16, #tpu.memory_space<vmem>>, %arg4: memref<1x32xf32, #tpu.memory_space<vmem>>, %arg5: memref<2x8x32xf32, #tpu.memory_space<vmem>>, %arg6: memref<2x1x32xf32, #tpu.memory_space<vmem>>) attributes {dimension_semantics = [#tpu.dimension_semantics<parallel>, #tpu.dimension_semantics<arbitrary>], iteration_bounds = array<i64: 1, 1>, scalar_prefetch = 0 : i64, scratch_operands = 0 : i64, tpu.core_type = #tpu.core_type<tc>, window_params = [{transform_indices = @transform_0, window_bounds = array<i64: 2, 8, 32>}, {pipeline_mode = #tpu.pipeline_mode<synchronous>, transform_indices = @transform_1, window_bounds = array<i64: 32, 32>}, {pipeline_mode = #tpu.pipeline_mode<synchronous>, transform_indices = @transform_2, window_bounds = array<i64: 1, 32>}, {transform_indices = @transform_3, window_bounds = array<i64: 2, 8, 32>}, {transform_indices = @transform_4, window_bounds = array<i64: 2, 1, 32>}]} {
    %c0 = arith.constant 0 : index
    %c0_0 = arith.constant 0 : index
    %c0_1 = arith.constant 0 : index
    %0 = vector.load %arg2[%c0, %c0_0, %c0_1] : memref<2x8x32xf32, #tpu.memory_space<vmem>>, vector<2x8x32xf32>
    %1 = vector.shape_cast %0 : vector<2x8x32xf32> to vector<16x32xf32>
    %2 = arith.truncf %1 : vector<16x32xf32> to vector<16x32xbf16>
    %c0_2 = arith.constant 0 : index
    %c0_3 = arith.constant 0 : index
    %3 = vector.load %arg3[%c0_2, %c0_3] : memref<32x32xbf16, #tpu.memory_space<vmem>>, vector<32x32xbf16>
    %cst = arith.constant dense<0.000000e+00> : vector<16x32xf32>
    %4 = tpu.matmul %2, %3, %cst {dimension_numbers = #tpu.dot_dimension_numbers<[1], [0], [0], [1], [0, 0, 1, 1], [], []>} : vector<16x32xbf16>, vector<32x32xbf16>, vector<16x32xf32> -> vector<16x32xf32>
    %c0_4 = arith.constant 0 : index
    %c0_5 = arith.constant 0 : index
    %5 = vector.load %arg4[%c0_4, %c0_5] : memref<1x32xf32, #tpu.memory_space<vmem>>, vector<1x32xf32>
    %6 = vector.broadcast %5 : vector<1x32xf32> to vector<16x32xf32>
    %7 = arith.addf %4, %6 : vector<16x32xf32>
    %8 = math.tanh %7 : vector<16x32xf32>
    %9 = vector.shape_cast %8 : vector<16x32xf32> to vector<2x8x32xf32>
    %c0_6 = arith.constant 0 : index
    %c0_7 = arith.constant 0 : index
    %c0_8 = arith.constant 0 : index
    %10 = vector.load %arg5[%c0_6, %c0_7, %c0_8] : memref<2x8x32xf32, #tpu.memory_space<vmem>>, vector<2x8x32xf32>
    tpu.vector_store %arg5[%c0_6, %c0_7, %c0_8], %9 {strides = array<i32>} : memref<2x8x32xf32, #tpu.memory_space<vmem>>, vector<2x8x32xf32>,
    %c0_i32 = arith.constant 0 : i32
    %11 = arith.cmpi eq, %arg1, %c0_i32 : i32
    %12 = arith.extui %11 : i1 to i32
    %c0_i32_9 = arith.constant 0 : i32
    %13 = arith.cmpi ne, %12, %c0_i32_9 : i32
    scf.if %13 {
      %cst_19 = arith.constant 0.000000e+00 : f32
      %22 = vector.broadcast %cst_19 : f32 to vector<2x1x32xf32>
      %c0_20 = arith.constant 0 : index
      %c0_21 = arith.constant 0 : index
      %c0_22 = arith.constant 0 : index
      %23 = vector.load %arg6[%c0_20, %c0_21, %c0_22] : memref<2x1x32xf32, #tpu.memory_space<vmem>>, vector<2x1x32xf32>
      tpu.vector_store %arg6[%c0_20, %c0_21, %c0_22], %22 {strides = array<i32>} : memref<2x1x32xf32, #tpu.memory_space<vmem>>, vector<2x1x32xf32>,
    } else {
    }
    %c0_10 = arith.constant 0 : index
    %c0_11 = arith.constant 0 : index
    %c0_12 = arith.constant 0 : index
    %14 = vector.load %arg6[%c0_10, %c0_11, %c0_12] : memref<2x1x32xf32, #tpu.memory_space<vmem>>, vector<2x1x32xf32>
    %cst_13 = arith.constant dense<0.000000e+00> : vector<2x32xf32>
    %15 = vector.multi_reduction <add>, %9, %cst_13 [1] : vector<2x8x32xf32> to vector<2x32xf32>
    %16 = vector.shape_cast %15 : vector<2x32xf32> to vector<2x1x32xf32>
    %17 = arith.addf %14, %16 : vector<2x1x32xf32>
    %c0_14 = arith.constant 0 : index
    %c0_15 = arith.constant 0 : index
    %c0_16 = arith.constant 0 : index
    %18 = vector.load %arg6[%c0_14, %c0_15, %c0_16] : memref<2x1x32xf32, #tpu.memory_space<vmem>>, vector<2x1x32xf32>
    tpu.vector_store %arg6[%c0_14, %c0_15, %c0_16], %17 {strides = array<i32>} : memref<2x1x32xf32, #tpu.memory_space<vmem>>, vector<2x1x32xf32>,
    %c0_i32_17 = arith.constant 0 : i32
    %19 = arith.cmpi eq, %arg1, %c0_i32_17 : i32
    %20 = arith.extui %19 : i1 to i32
    %c0_i32_18 = arith.constant 0 : i32
    %21 = arith.cmpi ne, %20, %c0_i32_18 : i32
    scf.if %21 {
      %c0_19 = arith.constant 0 : index
      %c0_20 = arith.constant 0 : index
      %c0_21 = arith.constant 0 : index
      %22 = vector.load %arg6[%c0_19, %c0_20, %c0_21] : memref<2x1x32xf32, #tpu.memory_space<vmem>>, vector<2x1x32xf32>
      %cst_22 = arith.constant 1.250000e-01 : f32
      %23 = vector.broadcast %cst_22 : f32 to vector<2x1x32xf32>
      %24 = arith.mulf %22, %23 : vector<2x1x32xf32>
      %c0_23 = arith.constant 0 : index
      %c0_24 = arith.constant 0 : index
      %c0_25 = arith.constant 0 : index
      %25 = vector.load %arg6[%c0_23, %c0_24, %c0_25] : memref<2x1x32xf32, #tpu.memory_space<vmem>>, vector<2x1x32xf32>
      tpu.vector_store %arg6[%c0_23, %c0_24, %c0_25], %24 {strides = array<i32>} : memref<2x1x32xf32, #tpu.memory_space<vmem>>, vector<2x1x32xf32>,
    } else {
    }
    return
  }
  func.func @transform_0(%arg0: i32, %arg1: i32) -> (i32, i32, i32) {
    %c0_i32 = arith.constant 0 : i32
    %c0_i32_0 = arith.constant 0 : i32
    return %arg0, %arg1, %c0_i32 : i32, i32, i32
  }
  func.func @transform_1(%arg0: i32, %arg1: i32) -> (i32, i32) {
    %c0_i32 = arith.constant 0 : i32
    %c0_i32_0 = arith.constant 0 : i32
    %c0_i32_1 = arith.constant 0 : i32
    return %c0_i32, %c0_i32_0 : i32, i32
  }
  func.func @transform_2(%arg0: i32, %arg1: i32) -> (i32, i32) {
    %c0_i32 = arith.constant 0 : i32
    %c0_i32_0 = arith.constant 0 : i32
    %c0_i32_1 = arith.constant 0 : i32
    return %c0_i32, %c0_i32_0 : i32, i32
  }
  func.func @transform_3(%arg0: i32, %arg1: i32) -> (i32, i32, i32) {
    %c0_i32 = arith.constant 0 : i32
    %c0_i32_0 = arith.constant 0 : i32
    return %arg0, %arg1, %c0_i32 : i32, i32, i32
  }
  func.func @transform_4(%arg0: i32, %arg1: i32) -> (i32, i32, i32) {
    %c0_i32 = arith.constant 0 : i32
    %c0_i32_0 = arith.constant 0 : i32
    %c0_i32_1 = arith.constant 0 : i32
    return %arg0, %c0_i32, %c0_i32_0 : i32, i32, i32
  }
}

module attributes {stable_mosaic.version = 11 : i64} {
  func.func @kernel(%arg0: i32, %arg1: i32, %arg2: memref<2x8x32xf32, #tpu.memory_space<vmem>>, %arg3: memref<32x32xbf16, #tpu.memory_space<vmem>>, %arg4: memref<1x32xf32, #tpu.memory_space<vmem>>, %arg5: memref<2x8x32xf32, #tpu.memory_space<vmem>>, %arg6: memref<2x1x32xf32, #tpu.memory_space<vmem>>) attributes {dimension_semantics = [#tpu.dimension_semantics<parallel>, #tpu.dimension_semantics<arbitrary>], iteration_bounds = array<i64: 1, 1>, scalar_prefetch = 0 : i64, scratch_operands = 0 : i64, tpu.core_type = #tpu.core_type<tc>, window_params = [{transform_indices = @transform_0, window_bounds = array<i64: 2, 8, 32>}, {pipeline_mode = #tpu.pipeline_mode<synchronous>, transform_indices = @transform_1, window_bounds = array<i64: 32, 32>}, {pipeline_mode = #tpu.pipeline_mode<synchronous>, transform_indices = @transform_2, window_bounds = array<i64: 1, 32>}, {transform_indices = @transform_3, window_bounds = array<i64: 2, 8, 32>}, {transform_indices = @transform_4, window_bounds = array<i64: 2, 1, 32>}]} {
    %c0 = arith.constant 0 : index
    %c0_0 = arith.constant 0 : index
    %c0_1 = arith.constant 0 : index
    %0 = vector.load %arg2[%c0, %c0_0, %c0_1] : memref<2x8x32xf32, #tpu.memory_space<vmem>>, vector<2x8x32xf32>
    %1 = vector.shape_cast %0 : vector<2x8x32xf32> to vector<16x32xf32>
    %2 = arith.truncf %1 : vector<16x32xf32> to vector<16x32xbf16>
    %c0_2 = arith.constant 0 : index
    %c0_3 = arith.constant 0 : index
    %3 = vector.load %arg3[%c0_2, %c0_3] : memref<32x32xbf16, #tpu.memory_space<vmem>>, vector<32x32xbf16>
    %cst = arith.constant dense<0.000000e+00> : vector<16x32xf32>
    %4 = tpu.matmul %2, %3, %cst {dimension_numbers = #tpu.dot_dimension_numbers<[1], [0], [0], [1], [0, 0, 1, 1], [], []>} : vector<16x32xbf16>, vector<32x32xbf16>, vector<16x32xf32> -> vector<16x32xf32>
    %c0_4 = arith.constant 0 : index
    %c0_5 = arith.constant 0 : index
    %5 = vector.load %arg4[%c0_4, %c0_5] : memref<1x32xf32, #tpu.memory_space<vmem>>, vector<1x32xf32>
    %6 = vector.broadcast %5 : vector<1x32xf32> to vector<16x32xf32>
    %7 = arith.addf %4, %6 : vector<16x32xf32>
    %8 = math.tanh %7 : vector<16x32xf32>
    %9 = vector.shape_cast %8 : vector<16x32xf32> to vector<2x8x32xf32>
    %c0_6 = arith.constant 0 : index
    %c0_7 = arith.constant 0 : index
    %c0_8 = arith.constant 0 : index
    %10 = vector.load %arg5[%c0_6, %c0_7, %c0_8] : memref<2x8x32xf32, #tpu.memory_space<vmem>>, vector<2x8x32xf32>
    tpu.vector_store %arg5[%c0_6, %c0_7, %c0_8], %9 {strides = array<i32>} : memref<2x8x32xf32, #tpu.memory_space<vmem>>, vector<2x8x32xf32>,
    %c0_i32 = arith.constant 0 : i32
    %11 = arith.cmpi eq, %arg1, %c0_i32 : i32
    %12 = arith.extui %11 : i1 to i32
    %c0_i32_9 = arith.constant 0 : i32
    %13 = arith.cmpi ne, %12, %c0_i32_9 : i32
    scf.if %13 {
      %cst_19 = arith.constant 0.000000e+00 : f32
      %22 = vector.broadcast %cst_19 : f32 to vector<2x1x32xf32>
      %c0_20 = arith.constant 0 : index
      %c0_21 = arith.constant 0 : index
      %c0_22 = arith.constant 0 : index
      %23 = vector.load %arg6[%c0_20, %c0_21, %c0_22] : memref<2x1x32xf32, #tpu.memory_space<vmem>>, vector<2x1x32xf32>
      tpu.vector_store %arg6[%c0_20, %c0_21, %c0_22], %22 {strides = array<i32>} : memref<2x1x32xf32, #tpu.memory_space<vmem>>, vector<2x1x32xf32>,
    } else {
    }
    %c0_10 = arith.constant 0 : index
    %c0_11 = arith.constant 0 : index
    %c0_12 = arith.constant 0 : index
    %14 = vector.load %arg6[%c0_10, %c0_11, %c0_12] : memref<2x1x32xf32, #tpu.memory_space<vmem>>, vector<2x1x32xf32>
    %cst_13 = arith.constant dense<0.000000e+00> : vector<2x32xf32>
    %15 = vector.multi_reduction <add>, %9, %cst_13 [1] : vector<2x8x32xf32> to vector<2x32xf32>
    %16 = vector.shape_cast %15 : vector<2x32xf32> to vector<2x1x32xf32>
    %17 = arith.addf %14, %16 : vector<2x1x32xf32>
    %c0_14 = arith.constant 0 : index
    %c0_15 = arith.constant 0 : index
    %c0_16 = arith.constant 0 : index
    %18 = vector.load %arg6[%c0_14, %c0_15, %c0_16] : memref<2x1x32xf32, #tpu.memory_space<vmem>>, vector<2x1x32xf32>
    tpu.vector_store %arg6[%c0_14, %c0_15, %c0_16], %17 {strides = array<i32>} : memref<2x1x32xf32, #tpu.memory_space<vmem>>, vector<2x1x32xf32>,
    %c0_i32_17 = arith.constant 0 : i32
    %19 = arith.cmpi eq, %arg1, %c0_i32_17 : i32
    %20 = arith.extui %19 : i1 to i32
    %c0_i32_18 = arith.constant 0 : i32
    %21 = arith.cmpi ne, %20, %c0_i32_18 : i32
    scf.if %21 {
      %c0_19 = arith.constant 0 : index
      %c0_20 = arith.constant 0 : index
      %c0_21 = arith.constant 0 : index
      %22 = vector.load %arg6[%c0_19, %c0_20, %c0_21] : memref<2x1x32xf32, #tpu.memory_space<vmem>>, vector<2x1x32xf32>
      %cst_22 = arith.constant 1.250000e-01 : f32
      %23 = vector.broadcast %cst_22 : f32 to vector<2x1x32xf32>
      %24 = arith.mulf %22, %23 : vector<2x1x32xf32>
      %c0_23 = arith.constant 0 : index
      %c0_24 = arith.constant 0 : index
      %c0_25 = arith.constant 0 : index
      %25 = vector.load %arg6[%c0_23, %c0_24, %c0_25] : memref<2x1x32xf32, #tpu.memory_space<vmem>>, vector<2x1x32xf32>
      tpu.vector_store %arg6[%c0_23, %c0_24, %c0_25], %24 {strides = array<i32>} : memref<2x1x32xf32, #tpu.memory_space<vmem>>, vector<2x1x32xf32>,
    } else {
    }
    return
  }
  func.func @transform_0(%arg0: i32, %arg1: i32) -> (i32, i32, i32) {
    %c0_i32 = arith.constant 0 : i32
    %c0_i32_0 = arith.constant 0 : i32
    return %arg0, %arg1, %c0_i32 : i32, i32, i32
  }
  func.func @transform_1(%arg0: i32, %arg1: i32) -> (i32, i32) {
    %c0_i32 = arith.constant 0 : i32
    %c0_i32_0 = arith.constant 0 : i32
    %c0_i32_1 = arith.constant 0 : i32
    return %c0_i32, %c0_i32_0 : i32, i32
  }
  func.func @transform_2(%arg0: i32, %arg1: i32) -> (i32, i32) {
    %c0_i32 = arith.constant 0 : i32
    %c0_i32_0 = arith.constant 0 : i32
    %c0_i32_1 = arith.constant 0 : i32
    return %c0_i32, %c0_i32_0 : i32, i32
  }
  func.func @transform_3(%arg0: i32, %arg1: i32) -> (i32, i32, i32) {
    %c0_i32 = arith.constant 0 : i32
    %c0_i32_0 = arith.constant 0 : i32
    return %arg0, %arg1, %c0_i32 : i32, i32, i32
  }
  func.func @transform_4(%arg0: i32, %arg1: i32) -> (i32, i32, i32) {
    %c0_i32 = arith.constant 0 : i32
    %c0_i32_0 = arith.constant 0 : i32
    %c0_i32_1 = arith.constant 0 : i32
    return %arg0, %c0_i32, %c0_i32_0 : i32, i32, i32
  }
}

</mosaic_0001>

<llo_original>
// kernel: tpu_custom_call.1
$region0: #{tpu_custom_call.1}
  #allocation0 [shape = 'u32[]', space=smem, size = 0x4, offset = 0x4, fixed_abs, tag = 'smem constant byte address 0x4 - core index']
  #allocation1 [shape = 'u32[144,128]{1,0:T(1,128)}', space=vmem, size = 0x12000, scoped, tag = 'internal scratch']
  %s0 = inlined_call_operand.hbm [shape: f32[2,8,32], index: 0, kind: input, shape index: {}]
  %s1 = inlined_call_operand.hbm [shape: bf16[32,32], index: 1, kind: input, shape index: {}]
  %s2 = inlined_call_operand.vmem [shape: f32[1,32], index: 2, kind: input, shape index: {}]
  %s3 = inlined_call_operand.hbm [shape: f32[2,8,32], index: 3, kind: output, shape index: {0}]
  %s4 = inlined_call_operand.hbm [shape: f32[2,1,32], index: 4, kind: output, shape index: {1}]
  %5 = xla_tuple %s3, %s4
  %s6 = sld [smem:[#allocation0]]
  $region46: #{tpu_custom_call.1} parent=0
    _
  %s8 = ssub.s32 1, %s6
  %s9 = scalar_select 0, %s8, %s6
  $region1: #{tpu_custom_call.1} parent=0
    #allocation2 [shape = 'u8[8192]{0}', space=vmem, size = 0x2000, scoped, tag = 'input window, operand 0, single buffered']
    #allocation3 [shape = 's32[1]{0}', space=sflag, size = 0x4, scoped, tag = 'scoped memory for tpu_custom_call.1']
    #allocation4 [shape = 's32[1]{0}', space=sflag, size = 0x4, scoped, tag = 'scoped memory for tpu_custom_call.1']
    #allocation5 [shape = 'u8[8192]{0}', space=vmem, size = 0x2000, scoped, tag = 'input window, operand 1, single buffered']
    #allocation6 [shape = 's32[1]{0}', space=sflag, size = 0x4, scoped, tag = 'scoped memory for tpu_custom_call.1']
    #allocation7 [shape = 'u8[8192]{0}', space=vmem, size = 0x2000, scoped, tag = 'output window, operand 0, single buffered']
    #allocation8 [shape = 'u8[1024]{0}', space=vmem, size = 0x400, scoped, tag = 'output window, operand 1, single buffered']
    #allocation9 [shape = 's32[1]{0}', space=sflag, size = 0x4, scoped, tag = 'scoped memory for tpu_custom_call.1']
    %10 = vsyncpa [#allocation3], 0
    %11 = vsyncpa [#allocation6], 0
    %12 = vsyncpa [#allocation4], 0
    %13 = vsyncpa [#allocation9], 0
    // Predicated region
    $region2: #{tpu_custom_call.1} parent=1 // pred_check
      _
    $region3: #{tpu_custom_call.1} parent=1 // pred_check_branch
      %15 = sbr.rel (0) target = $region5
    $region4: #{tpu_custom_call.1} parent=1 // pred_region
      %s17 = ssub.s32 256, 256
      %18 = vsyncadd [#allocation3], %s17
      %s19 = sshll.u32 [#allocation2], 4
      %s20 = int_to_ptr.vmem [resolvable:$true] %s19
      %25 = dma.hbm_to_vmem [thread:$0]  %s0, 256, %s20, [#allocation3], 128, 128, 8
    $region5: #{tpu_custom_call.1} parent=1 // pred_fallthru
      _
    // Predicated region
    $region6: #{tpu_custom_call.1} parent=1 // pred_check
      _
    $region7: #{tpu_custom_call.1} parent=1 // pred_check_branch
      %27 = sbr.rel (0) target = $region9
    $region8: #{tpu_custom_call.1} parent=1 // pred_region
      %s29 = ssub.s32 256, 256
      %30 = vsyncadd [#allocation6], %s29
      %s31 = sshll.u32 [#allocation5], 4
      %s32 = int_to_ptr.vmem [resolvable:$true] %s31
      %37 = dma.hbm_to_vmem [thread:$0]  %s1, 256, %s32, [#allocation6], 64, 64, 4
    $region9: #{tpu_custom_call.1} parent=1 // pred_fallthru
      _
    // Predicated region
    $region10: #{tpu_custom_call.1} parent=1 // pred_check
      _
    $region11: #{tpu_custom_call.1} parent=1 // pred_check_branch
      %39 = sbr.rel (0) target = $region13
    $region12: #{tpu_custom_call.1} parent=1 // pred_region
      _
    $region13: #{tpu_custom_call.1} parent=1 // pred_fallthru
      _
    // Predicated region
    $region14: #{tpu_custom_call.1} parent=1 // pred_check
      _
    $region15: #{tpu_custom_call.1} parent=1 // pred_check_branch
      %41 = sbr.rel (0) target = $region17
    $region16: #{tpu_custom_call.1} parent=1 // pred_region
      %42 = dma.done [#allocation3], 256
    $region17: #{tpu_custom_call.1} parent=1 // pred_fallthru
      _
    // Predicated region
    $region18: #{tpu_custom_call.1} parent=1 // pred_check
      _
    $region19: #{tpu_custom_call.1} parent=1 // pred_check_branch
      %44 = sbr.rel (0) target = $region21
    $region20: #{tpu_custom_call.1} parent=1 // pred_region
      %45 = dma.done [#allocation6], 256
    $region21: #{tpu_custom_call.1} parent=1 // pred_fallthru
      _
    %v47 = vld [vmem:[#allocation2] sm:$0xff]
    %v48 = vld [vmem:[#allocation2 + $0x8] sm:$0xff]
    %v49 = vpack.c.bf16 %v48, %v47
    %v50 = vld [vmem:[#allocation5] sm:$0xf]
    %v51 = vld [vmem:[#allocation5 + $0x4] sm:$0xf]
    %v52 = vld [vmem:[#allocation5 + $0x8] sm:$0xf]
    %v53 = vld [vmem:[#allocation5 + $0xc] sm:$0xf]
    %v54 = vld [vmem:[%s2] sm:$0x1]
    %v56 = vlaneseq
    %v57 = vshrl.u32 %v56, 7
    %v58 = vsub.s32 0, %v57
    %v59 = vrot.slane %v54, %v58
    %v65 = vunpack.c.l.b16 %v50
    %v66 = vunpack.c.l.b16 %v51
    %v67 = vunpack.c.l.b16 %v52
    %v68 = vunpack.c.l.b16 %v53
    %v69 = vpack.c.b16 %v66, %v65
    %v70 = vpack.c.b16 %v68, %v67
    %vm73 = vcmask 261120
    %v75 = vsel %vm73, %v49, 0
    %77 = vmatprep.subr.bf16.mxu0 0
    %78 = vmatpush1.bf16.msra.mxu0 0
    %79 = vmatprep.subr.bf16.mxu0 0
    %80 = vmatpush1.bf16.msra.mxu0 0
    %81 = vmatprep.subr.bf16.mxu0 0
    %82 = vmatpush1.bf16.msra.mxu0 0
    %83 = vmatprep.subr.bf16.mxu0 0
    %84 = vmatpush1.bf16.msra.mxu0 0
    %85 = vmatprep.subr.bf16.mxu0 0
    %86 = vmatpush1.bf16.msra.mxu0 0
    %87 = vmatprep.subr.bf16.mxu0 0
    %88 = vmatpush1.bf16.msra.mxu0 0
    %89 = vmatprep.subr.bf16.mxu0 0
    %90 = vmatpush1.bf16.msra.mxu0 %v70
    %91 = vmatprep.subr.bf16.mxu0 0
    %92 = vmatpush1.bf16.msra.mxu0 %v69
    %93 = vmatprep.subr.bf16.mxu0 0
    %94 = vmatpush2.bf16.msra.mxu0 0
    %95 = vmatprep.subr.bf16.mxu0 0
    %96 = vmatpush2.bf16.msra.mxu0 0
    %97 = vmatprep.subr.bf16.mxu0 0
    %98 = vmatpush2.bf16.msra.mxu0 0
    %99 = vmatprep.subr.bf16.mxu0 0
    %100 = vmatpush2.bf16.msra.mxu0 0
    %101 = vmatprep.subr.bf16.mxu0 0
    %102 = vmatpush2.bf16.msra.mxu0 0
    %103 = vmatprep.subr.bf16.mxu0 0
    %104 = vmatpush2.bf16.msra.mxu0 0
    %105 = vmatprep.subr.bf16.mxu0 0
    %106 = vmatpush2.bf16.msra.mxu0 0
    %107 = vmatprep.subr.bf16.mxu0 0
    %108 = vmatpush2.bf16.msra.mxu0 0
    %109 = vmatprep.mubr.bf16.mxu0 0
    %110 = vmatmul.mubr.bf16.gmra.mxu0 %v75
    %v111 = vpop.f32.mrf.mxu0
    %v112 = vadd.f32 %v59, %v111
    %v113 = vpop.f32.mrf.mxu0
    %v114 = vpop.f32.mrf.mxu0
    %v115 = vadd.f32 %v59, %v114
    %v116 = vpop.f32.mrf.mxu0
    %117 = vdwg.mxu0
    %v118 = vtanh.pop %v112
    %v119 = vtanh.pop %v115
    %120 = vst.msk [vmem:[#allocation7] sm:$0xff] %vm73, %v118
    %121 = vst.msk [vmem:[#allocation7 + $0x8] sm:$0xff] %vm73, %v119
    %p122 = scmp.eq.s32.totalorder 0, 0
    // Predicated region
    $region22: #{tpu_custom_call.1} parent=1 // pred_check
      %p123 = pneg %p122
    $region23: #{tpu_custom_call.1} parent=1 // pred_check_branch
      %125 = sbr.rel (%p123) target = $region25
    $region24: #{tpu_custom_call.1} parent=1 // pred_region
      %vm126 = vcmask 253952
      %127 = vst.msk [vmem:[#allocation8] sm:$0x1] %vm126, 0.0
      %128 = vst.msk [vmem:[#allocation8 + $0x1] sm:$0x1] %vm126, 0.0
    $region25: #{tpu_custom_call.1} parent=1 // pred_fallthru
      _
    %v129 = vld [vmem:[#allocation8] sm:$0x1]
    %v130 = vld [vmem:[#allocation8 + $0x1] sm:$0x1]
    %v131 = vsel %vm73, %v118, 0.0
    %v132 = vrot.slane %v131, 4
    %v133 = vadd.f32 %v131, %v132
    %v134 = vrot.slane %v133, 2
    %v135 = vadd.f32 %v133, %v134
    %v136 = vrot.slane %v135, 1
    %v137 = vadd.f32 %v135, %v136
    %v138 = vsel %vm73, %v119, 0.0
    %v139 = vrot.slane %v138, 4
    %v140 = vadd.f32 %v138, %v139
    %v141 = vrot.slane %v140, 2
    %v142 = vadd.f32 %v140, %v141
    %v143 = vrot.slane %v142, 1
    %v144 = vadd.f32 %v142, %v143
    %v145 = vadd.f32 %v129, %v137
    %v146 = vadd.f32 %v130, %v144
    %vm147 = vcmask 253952
    %148 = vst.msk [vmem:[#allocation8] sm:$0x1] %vm147, %v145
    %149 = vst.msk [vmem:[#allocation8 + $0x1] sm:$0x1] %vm147, %v146
    // Predicated region
    $region26: #{tpu_custom_call.1} parent=1 // pred_check
      %p150 = pneg %p122
    $region27: #{tpu_custom_call.1} parent=1 // pred_check_branch
      %152 = sbr.rel (%p150) target = $region29
    $region28: #{tpu_custom_call.1} parent=1 // pred_region
      %v153 = vld [vmem:[#allocation8] sm:$0x1]
      %v154 = vld [vmem:[#allocation8 + $0x1] sm:$0x1]
      %v155 = vmul.f32 %v153, 0.125
      %v156 = vmul.f32 %v154, 0.125
      %157 = vst.msk [vmem:[#allocation8] sm:$0x1] %vm147, %v155
      %158 = vst.msk [vmem:[#allocation8 + $0x1] sm:$0x1] %vm147, %v156
    $region29: #{tpu_custom_call.1} parent=1 // pred_fallthru
      _
    // Predicated region
    $region30: #{tpu_custom_call.1} parent=1 // pred_check
      _
    $region31: #{tpu_custom_call.1} parent=1 // pred_check_branch
      %160 = sbr.rel (0) target = $region33
    $region32: #{tpu_custom_call.1} parent=1 // pred_region
      %s162 = ssub.s32 256, 256
      %163 = vsyncadd [#allocation4], %s162
      %s164 = sshll.u32 [#allocation7], 4
      %s165 = int_to_ptr.vmem [resolvable:$true] %s164
      %170 = dma.vmem_to_hbm [thread:$0]  %s165, 256, %s3, [#allocation4], 128, 128, 8
    $region33: #{tpu_custom_call.1} parent=1 // pred_fallthru
      _
    // Predicated region
    $region34: #{tpu_custom_call.1} parent=1 // pred_check
      _
    $region35: #{tpu_custom_call.1} parent=1 // pred_check_branch
      %172 = sbr.rel (0) target = $region37
    $region36: #{tpu_custom_call.1} parent=1 // pred_region
      %s174 = ssub.s32 32, 32
      %175 = vsyncadd [#allocation9], %s174
      %s176 = sshll.u32 [#allocation8], 4
      %s177 = int_to_ptr.vmem [resolvable:$true] %s176
      %182 = dma.vmem_to_hbm [thread:$0]  %s177, 32, %s4, [#allocation9], 16, 16, 1
    $region37: #{tpu_custom_call.1} parent=1 // pred_fallthru
      _
    // Predicated region
    $region38: #{tpu_custom_call.1} parent=1 // pred_check
      _
    $region39: #{tpu_custom_call.1} parent=1 // pred_check_branch
      %184 = sbr.rel (0) target = $region41
    $region40: #{tpu_custom_call.1} parent=1 // pred_region
      %185 = dma.done [#allocation4], 256
    $region41: #{tpu_custom_call.1} parent=1 // pred_fallthru
      _
    // Predicated region
    $region42: #{tpu_custom_call.1} parent=1 // pred_check
      _
    $region43: #{tpu_custom_call.1} parent=1 // pred_check_branch
      %187 = sbr.rel (0) target = $region45
    $region44: #{tpu_custom_call.1} parent=1 // pred_region
      %188 = dma.done [#allocation9], 32
    $region45: #{tpu_custom_call.1} parent=1 // pred_fallthru
      _
    %189 = vsyncpa [#allocation3], 1
    %190 = vsyncpa [#allocation6], 1
    %191 = vsyncpa [#allocation4], 1
    %192 = vsyncpa [#allocation9], 1

// kernel: tpu_custom_call.1
$region0: #{tpu_custom_call.1}
  #allocation0 [shape = 'u32[]', space=smem, size = 0x4, offset = 0x4, fixed_abs, tag = 'smem constant byte address 0x4 - core index']
  #allocation1 [shape = 'u32[144,128]{1,0:T(1,128)}', space=vmem, size = 0x12000, scoped, tag = 'internal scratch']
  %s0 = inlined_call_operand.hbm [shape: f32[2,8,32], index: 0, kind: input, shape index: {}]
  %s1 = inlined_call_operand.hbm [shape: bf16[32,32], index: 1, kind: input, shape index: {}]
  %s2 = inlined_call_operand.vmem [shape: f32[1,32], index: 2, kind: input, shape index: {}]
  %s3 = inlined_call_operand.hbm [shape: f32[2,8,32], index: 3, kind: output, shape index: {0}]
  %s4 = inlined_call_operand.hbm [shape: f32[2,1,32], index: 4, kind: output, shape index: {1}]
  %5 = xla_tuple %s3, %s4
  %s6 = sld [smem:[#allocation0]]
  $region46: #{tpu_custom_call.1} parent=0
    _
  %s8 = ssub.s32 1, %s6
  %s9 = scalar_select 0, %s8, %s6
  $region1: #{tpu_custom_call.1} parent=0
    #allocation2 [shape = 'u8[8192]{0}', space=vmem, size = 0x2000, scoped, tag = 'input window, operand 0, single buffered']
    #allocation3 [shape = 's32[1]{0}', space=sflag, size = 0x4, scoped, tag = 'scoped memory for tpu_custom_call.1']
    #allocation4 [shape = 's32[1]{0}', space=sflag, size = 0x4, scoped, tag = 'scoped memory for tpu_custom_call.1']
    #allocation5 [shape = 'u8[8192]{0}', space=vmem, size = 0x2000, scoped, tag = 'input window, operand 1, single buffered']
    #allocation6 [shape = 's32[1]{0}', space=sflag, size = 0x4, scoped, tag = 'scoped memory for tpu_custom_call.1']
    #allocation7 [shape = 'u8[8192]{0}', space=vmem, size = 0x2000, scoped, tag = 'output window, operand 0, single buffered']
    #allocation8 [shape = 'u8[1024]{0}', space=vmem, size = 0x400, scoped, tag = 'output window, operand 1, single buffered']
    #allocation9 [shape = 's32[1]{0}', space=sflag, size = 0x4, scoped, tag = 'scoped memory for tpu_custom_call.1']
    %10 = vsyncpa [#allocation3], 0
    %11 = vsyncpa [#allocation6], 0
    %12 = vsyncpa [#allocation4], 0
    %13 = vsyncpa [#allocation9], 0
    // Predicated region
    $region2: #{tpu_custom_call.1} parent=1 // pred_check
      _
    $region3: #{tpu_custom_call.1} parent=1 // pred_check_branch
      %15 = sbr.rel (0) target = $region5
    $region4: #{tpu_custom_call.1} parent=1 // pred_region
      %s17 = ssub.s32 256, 256
      %18 = vsyncadd [#allocation3], %s17
      %s19 = sshll.u32 [#allocation2], 4
      %s20 = int_to_ptr.vmem [resolvable:$true] %s19
      %25 = dma.hbm_to_vmem [thread:$0]  %s0, 256, %s20, [#allocation3], 128, 128, 8
    $region5: #{tpu_custom_call.1} parent=1 // pred_fallthru
      _
    // Predicated region
    $region6: #{tpu_custom_call.1} parent=1 // pred_check
      _
    $region7: #{tpu_custom_call.1} parent=1 // pred_check_branch
      %27 = sbr.rel (0) target = $region9
    $region8: #{tpu_custom_call.1} parent=1 // pred_region
      %s29 = ssub.s32 256, 256
      %30 = vsyncadd [#allocation6], %s29
      %s31 = sshll.u32 [#allocation5], 4
      %s32 = int_to_ptr.vmem [resolvable:$true] %s31
      %37 = dma.hbm_to_vmem [thread:$0]  %s1, 256, %s32, [#allocation6], 64, 64, 4
    $region9: #{tpu_custom_call.1} parent=1 // pred_fallthru
      _
    // Predicated region
    $region10: #{tpu_custom_call.1} parent=1 // pred_check
      _
    $region11: #{tpu_custom_call.1} parent=1 // pred_check_branch
      %39 = sbr.rel (0) target = $region13
    $region12: #{tpu_custom_call.1} parent=1 // pred_region
      _
    $region13: #{tpu_custom_call.1} parent=1 // pred_fallthru
      _
    // Predicated region
    $region14: #{tpu_custom_call.1} parent=1 // pred_check
      _
    $region15: #{tpu_custom_call.1} parent=1 // pred_check_branch
      %41 = sbr.rel (0) target = $region17
    $region16: #{tpu_custom_call.1} parent=1 // pred_region
      %42 = dma.done [#allocation3], 256
    $region17: #{tpu_custom_call.1} parent=1 // pred_fallthru
      _
    // Predicated region
    $region18: #{tpu_custom_call.1} parent=1 // pred_check
      _
    $region19: #{tpu_custom_call.1} parent=1 // pred_check_branch
      %44 = sbr.rel (0) target = $region21
    $region20: #{tpu_custom_call.1} parent=1 // pred_region
      %45 = dma.done [#allocation6], 256
    $region21: #{tpu_custom_call.1} parent=1 // pred_fallthru
      _
    %v47 = vld [vmem:[#allocation2] sm:$0xff]
    %v48 = vld [vmem:[#allocation2 + $0x8] sm:$0xff]
    %v49 = vpack.c.bf16 %v48, %v47
    %v50 = vld [vmem:[#allocation5] sm:$0xf]
    %v51 = vld [vmem:[#allocation5 + $0x4] sm:$0xf]
    %v52 = vld [vmem:[#allocation5 + $0x8] sm:$0xf]
    %v53 = vld [vmem:[#allocation5 + $0xc] sm:$0xf]
    %v54 = vld [vmem:[%s2] sm:$0x1]
    %v56 = vlaneseq
    %v57 = vshrl.u32 %v56, 7
    %v58 = vsub.s32 0, %v57
    %v59 = vrot.slane %v54, %v58
    %v65 = vunpack.c.l.b16 %v50
    %v66 = vunpack.c.l.b16 %v51
    %v67 = vunpack.c.l.b16 %v52
    %v68 = vunpack.c.l.b16 %v53
    %v69 = vpack.c.b16 %v66, %v65
    %v70 = vpack.c.b16 %v68, %v67
    %vm73 = vcmask 261120
    %v75 = vsel %vm73, %v49, 0
    %77 = vmatprep.subr.bf16.mxu0 0
    %78 = vmatpush1.bf16.msra.mxu0 0
    %79 = vmatprep.subr.bf16.mxu0 0
    %80 = vmatpush1.bf16.msra.mxu0 0
    %81 = vmatprep.subr.bf16.mxu0 0
    %82 = vmatpush1.bf16.msra.mxu0 0
    %83 = vmatprep.subr.bf16.mxu0 0
    %84 = vmatpush1.bf16.msra.mxu0 0
    %85 = vmatprep.subr.bf16.mxu0 0
    %86 = vmatpush1.bf16.msra.mxu0 0
    %87 = vmatprep.subr.bf16.mxu0 0
    %88 = vmatpush1.bf16.msra.mxu0 0
    %89 = vmatprep.subr.bf16.mxu0 0
    %90 = vmatpush1.bf16.msra.mxu0 %v70
    %91 = vmatprep.subr.bf16.mxu0 0
    %92 = vmatpush1.bf16.msra.mxu0 %v69
    %93 = vmatprep.subr.bf16.mxu0 0
    %94 = vmatpush2.bf16.msra.mxu0 0
    %95 = vmatprep.subr.bf16.mxu0 0
    %96 = vmatpush2.bf16.msra.mxu0 0
    %97 = vmatprep.subr.bf16.mxu0 0
    %98 = vmatpush2.bf16.msra.mxu0 0
    %99 = vmatprep.subr.bf16.mxu0 0
    %100 = vmatpush2.bf16.msra.mxu0 0
    %101 = vmatprep.subr.bf16.mxu0 0
    %102 = vmatpush2.bf16.msra.mxu0 0
    %103 = vmatprep.subr.bf16.mxu0 0
    %104 = vmatpush2.bf16.msra.mxu0 0
    %105 = vmatprep.subr.bf16.mxu0 0
    %106 = vmatpush2.bf16.msra.mxu0 0
    %107 = vmatprep.subr.bf16.mxu0 0
    %108 = vmatpush2.bf16.msra.mxu0 0
    %109 = vmatprep.mubr.bf16.mxu0 0
    %110 = vmatmul.mubr.bf16.gmra.mxu0 %v75
    %v111 = vpop.f32.mrf.mxu0
    %v112 = vadd.f32 %v59, %v111
    %v113 = vpop.f32.mrf.mxu0
    %v114 = vpop.f32.mrf.mxu0
    %v115 = vadd.f32 %v59, %v114
    %v116 = vpop.f32.mrf.mxu0
    %117 = vdwg.mxu0
    %v118 = vtanh.pop %v112
    %v119 = vtanh.pop %v115
    %120 = vst.msk [vmem:[#allocation7] sm:$0xff] %vm73, %v118
    %121 = vst.msk [vmem:[#allocation7 + $0x8] sm:$0xff] %vm73, %v119
    %p122 = scmp.eq.s32.totalorder 0, 0
    // Predicated region
    $region22: #{tpu_custom_call.1} parent=1 // pred_check
      %p123 = pneg %p122
    $region23: #{tpu_custom_call.1} parent=1 // pred_check_branch
      %125 = sbr.rel (%p123) target = $region25
    $region24: #{tpu_custom_call.1} parent=1 // pred_region
      %vm126 = vcmask 253952
      %127 = vst.msk [vmem:[#allocation8] sm:$0x1] %vm126, 0.0
      %128 = vst.msk [vmem:[#allocation8 + $0x1] sm:$0x1] %vm126, 0.0
    $region25: #{tpu_custom_call.1} parent=1 // pred_fallthru
      _
    %v129 = vld [vmem:[#allocation8] sm:$0x1]
    %v130 = vld [vmem:[#allocation8 + $0x1] sm:$0x1]
    %v131 = vsel %vm73, %v118, 0.0
    %v132 = vrot.slane %v131, 4
    %v133 = vadd.f32 %v131, %v132
    %v134 = vrot.slane %v133, 2
    %v135 = vadd.f32 %v133, %v134
    %v136 = vrot.slane %v135, 1
    %v137 = vadd.f32 %v135, %v136
    %v138 = vsel %vm73, %v119, 0.0
    %v139 = vrot.slane %v138, 4
    %v140 = vadd.f32 %v138, %v139
    %v141 = vrot.slane %v140, 2
    %v142 = vadd.f32 %v140, %v141
    %v143 = vrot.slane %v142, 1
    %v144 = vadd.f32 %v142, %v143
    %v145 = vadd.f32 %v129, %v137
    %v146 = vadd.f32 %v130, %v144
    %vm147 = vcmask 253952
    %148 = vst.msk [vmem:[#allocation8] sm:$0x1] %vm147, %v145
    %149 = vst.msk [vmem:[#allocation8 + $0x1] sm:$0x1] %vm147, %v146
    // Predicated region
    $region26: #{tpu_custom_call.1} parent=1 // pred_check
      %p150 = pneg %p122
    $region27: #{tpu_custom_call.1} parent=1 // pred_check_branch
      %152 = sbr.rel (%p150) target = $region29
    $region28: #{tpu_custom_call.1} parent=1 // pred_region
      %v153 = vld [vmem:[#allocation8] sm:$0x1]
      %v154 = vld [vmem:[#allocation8 + $0x1] sm:$0x1]
      %v155 = vmul.f32 %v153, 0.125
      %v156 = vmul.f32 %v154, 0.125
      %157 = vst.msk [vmem:[#allocation8] sm:$0x1] %vm147, %v155
      %158 = vst.msk [vmem:[#allocation8 + $0x1] sm:$0x1] %vm147, %v156
    $region29: #{tpu_custom_call.1} parent=1 // pred_fallthru
      _
    // Predicated region
    $region30: #{tpu_custom_call.1} parent=1 // pred_check
      _
    $region31: #{tpu_custom_call.1} parent=1 // pred_check_branch
      %160 = sbr.rel (0) target = $region33
    $region32: #{tpu_custom_call.1} parent=1 // pred_region
      %s162 = ssub.s32 256, 256
      %163 = vsyncadd [#allocation4], %s162
      %s164 = sshll.u32 [#allocation7], 4
      %s165 = int_to_ptr.vmem [resolvable:$true] %s164
      %170 = dma.vmem_to_hbm [thread:$0]  %s165, 256, %s3, [#allocation4], 128, 128, 8
    $region33: #{tpu_custom_call.1} parent=1 // pred_fallthru
      _
    // Predicated region
    $region34: #{tpu_custom_call.1} parent=1 // pred_check
      _
    $region35: #{tpu_custom_call.1} parent=1 // pred_check_branch
      %172 = sbr.rel (0) target = $region37
    $region36: #{tpu_custom_call.1} parent=1 // pred_region
      %s174 = ssub.s32 32, 32
      %175 = vsyncadd [#allocation9], %s174
      %s176 = sshll.u32 [#allocation8], 4
      %s177 = int_to_ptr.vmem [resolvable:$true] %s176
      %182 = dma.vmem_to_hbm [thread:$0]  %s177, 32, %s4, [#allocation9], 16, 16, 1
    $region37: #{tpu_custom_call.1} parent=1 // pred_fallthru
      _
    // Predicated region
    $region38: #{tpu_custom_call.1} parent=1 // pred_check
      _
    $region39: #{tpu_custom_call.1} parent=1 // pred_check_branch
      %184 = sbr.rel (0) target = $region41
    $region40: #{tpu_custom_call.1} parent=1 // pred_region
      %185 = dma.done [#allocation4], 256
    $region41: #{tpu_custom_call.1} parent=1 // pred_fallthru
      _
    // Predicated region
    $region42: #{tpu_custom_call.1} parent=1 // pred_check
      _
    $region43: #{tpu_custom_call.1} parent=1 // pred_check_branch
      %187 = sbr.rel (0) target = $region45
    $region44: #{tpu_custom_call.1} parent=1 // pred_region
      %188 = dma.done [#allocation9], 32
    $region45: #{tpu_custom_call.1} parent=1 // pred_fallthru
      _
    %189 = vsyncpa [#allocation3], 1
    %190 = vsyncpa [#allocation6], 1
    %191 = vsyncpa [#allocation4], 1
    %192 = vsyncpa [#allocation9], 1

</llo_original>
